<compile_context>
chip_gen: v7x
topology: tpu7x:2x2x1
jax: 0.10.0
libtpu: 0.0.40
codegen_flags: <defaults>
</compile_context>

<pallas_src>
import jax
import jax.numpy as jnp
from jax import lax
from jax.experimental import pallas as pl
from jax.experimental.pallas import tpu as pltpu


def _round_up(x, m):
    return ((x + m - 1) // m) * m


def _make_kernel(has_bias, use_rx_cache, n_axis):
    def kernel(*refs):
        if has_bias:
            r_ref, s_ref, b_ref, x_ref, w_ref, o_ref = refs[:6]
            scratch = refs[6:]
        else:
            r_ref, s_ref, x_ref, w_ref, o_ref = refs[:5]
            b_ref = None
            scratch = refs[5:]
        acc_ref = scratch[0]
        rx_ref = scratch[1] if use_rx_cache else None

        k = pl.program_id(3)

        @pl.when(k == 0)
        def _():
            acc_ref[...] = jnp.zeros_like(acc_ref)

        if use_rx_cache:
            # rx depends only on (e, m, k); fill the (nk, tm, tk) panel on the first N block
            # of each (e, m) and reuse it for the remaining N blocks (n is "arbitrary", so
            # it is never split across TensorCores and the fill always precedes the reads).
            n = pl.program_id(n_axis)

            @pl.when(n == 0)
            def _():
                rx_ref[k] = x_ref[...] * r_ref[...]

            rx = rx_ref[k]
        else:
            rx = x_ref[...] * r_ref[...]          # (tm, tk) * (1|tm, tk)  — VPU

        # NT matmul: contract axis 1 of both operands -> (tm, tn) on the MXU.
        # Weight keeps the PyTorch (Fout, Fin) layout; Mosaic feeds the transposed RHS natively.
        acc_ref[...] += lax.dot_general(
            rx, w_ref[...],
            dimension_numbers=(((1,), (1,)), ((), ())),
            preferred_element_type=jnp.float32)

        @pl.when(k == pl.num_programs(3) - 1)
        def _():
            y = acc_ref[...] * s_ref[...]         # (tm, tn) * (1|tm, tn)
            if has_bias:
                y = y + b_ref[...]
            o_ref[...] = y.astype(o_ref.dtype)

    return kernel


def linear_batch_ensemble(x, weight, r_factor, s_factor, bias=None, *,
                          mxu_dtype=jnp.bfloat16):
    """BatchEnsemble linear forward (training path).

    x:        (E * per, Fin)
    weight:   (Fout, Fin)   -- PyTorch nn.Linear layout (NOT transposed)
    r_factor: (E, Fin)
    s_factor: (E, Fout)
    bias:     (E, Fout) or None
    mxu_dtype: dtype for the matmul operand streams (x, W, r); None keeps the input dtype.
               Accumulation is always f32; output keeps x.dtype.
    returns:  (E * per, Fout)
    """
    E, fin = r_factor.shape
    fout = s_factor.shape[1]
    total = x.shape[0]
    assert total % E == 0, "batch must be divisible by ensemble_size"
    per = total // E
    out_dtype = x.dtype
    has_bias = bias is not None

    # --- one-time wrapper casts: the big HBM streams (x, W) and r move at compute width ---
    cdt = jnp.dtype(mxu_dtype) if mxu_dtype is not None else jnp.dtype(x.dtype)
    x_c = x.astype(cdt)
    w_c = weight.astype(cdt)
    r_c = r_factor.astype(cdt)
    s_c = s_factor.astype(jnp.float32)            # epilogue runs on the f32 accumulator
    b_c = bias.astype(jnp.float32) if has_bias else None

    # --- tiny-problem grid collapse: fold E into the row dimension -------------------------
    collapse = (E * per) <= 512
    if collapse:
        e_grid, rows = 1, E * per
        x3 = x_c.reshape(1, rows, fin)
        r3 = jnp.repeat(r_c, per, axis=0).reshape(1, rows, fin)
        s3 = jnp.repeat(s_c, per, axis=0).reshape(1, rows, fout)
        b3 = jnp.repeat(b_c, per, axis=0).reshape(1, rows, fout) if has_bias else None
    else:
        e_grid, rows = E, per
        x3 = x_c.reshape(E, per, fin)
        r3 = r_c.reshape(E, 1, fin)
        s3 = s_c.reshape(E, 1, fout)
        b3 = b_c.reshape(E, 1, fout) if has_bias else None

    # --- tile sizes -------------------------------------------------------------------------
    # M: cap 512; always a multiple of 8 (sublane-dense loads/stores).
    if rows <= 512:
        tm = _round_up(rows, 8)
        rows_p = tm
    else:
        tm = 512 if (_round_up(rows, 512) - rows) <= rows // 4 else 256
        rows_p = _round_up(rows, tm)

    # K: multiple of 128 always; when tiling pick tk from {512, 256} (keep the 256-wide MXU full).
    fin_p = _round_up(fin, 128)
    if fin_p > 1024:
        p512, p256 = _round_up(fin, 512), _round_up(fin, 256)
        tk, fin_p = (512, p512) if (p512 - p256) <= fin // 8 else (256, p256)
    else:
        tk = fin_p

    # N: lane-dense multiples of 128; when tiling pick tn from {512, 256}.
    fout_p = _round_up(fout, 128)
    if fout_p > 512:
        p512, p256 = _round_up(fout, 512), _round_up(fout, 256)
        tn, fout_p = (512, p512) if (p512 - p256) <= fout // 8 else (256, p256)
    else:
        tn = fout_p

    m_blocks = rows_p // tm
    n_blocks = fout_p // tn
    # v7x has 2 TensorCores: a degenerate single-program grid leaves half the chip idle.
    if e_grid * m_blocks * n_blocks == 1 and tn % 256 == 0:
        tn //= 2
        n_blocks = fout_p // tn
    nk = fin_p // tk

    # --- zero padding up to tile boundaries (zero K / rows contribute nothing) --------------
    def _pad(a, axis, target):
        if a.shape[axis] == target:
            return a
        widths = [(0, 0)] * a.ndim
        widths[axis] = (0, target - a.shape[axis])
        return jnp.pad(a, widths)

    x3 = _pad(_pad(x3, 1, rows_p), 2, fin_p)
    if collapse:
        r3 = _pad(_pad(r3, 1, rows_p), 2, fin_p)
        s3 = _pad(_pad(s3, 1, rows_p), 2, fout_p)
        if has_bias:
            b3 = _pad(_pad(b3, 1, rows_p), 2, fout_p)
    else:
        r3 = _pad(r3, 2, fin_p)
        s3 = _pad(s3, 2, fout_p)
        if has_bias:
            b3 = _pad(b3, 2, fout_p)
    w_p = _pad(_pad(w_c, 0, fout_p), 1, fin_p)     # weight stays (Fout, Fin)

    # --- grid-axis order: largest parallel axis first (megacore split); K innermost ---------
    ext = {"e": e_grid, "m": m_blocks, "n": n_blocks}
    order = sorted(("e", "m", "n"), key=lambda a: -ext[a])     # stable
    pos = {a: i for i, a in enumerate(order)}
    pe, pm, pn = pos["e"], pos["m"], pos["n"]

    # rx cache is only valid when N is the innermost parallel axis (fill at n==0 precedes reads).
    rx_panel_bytes = nk * tm * tk * cdt.itemsize
    use_rx_cache = (n_blocks > 1) and (pn == 2) and (rx_panel_bytes <= (8 << 20))

    fac_bm = tm if collapse else 1                 # row extent of the r/s/bias blocks

    if collapse:
        r_idx = lambda *g: (g[pe], g[pm], g[3])
        s_idx = lambda *g: (g[pe], g[pm], g[pn])
    else:
        r_idx = lambda *g: (g[pe], 0, g[3])
        s_idx = lambda *g: (g[pe], 0, g[pn])
    x_idx = lambda *g: (g[pe], g[pm], g[3])
    w_idx = lambda *g: (g[pn], g[3])
    o_idx = lambda *g: (g[pe], g[pm], g[pn])

    in_specs = [
        pl.BlockSpec((pl.Squeezed(), fac_bm, tk), r_idx),      # r_factor per member/row
        pl.BlockSpec((pl.Squeezed(), fac_bm, tn), s_idx),      # s_factor per member/row
    ]
    args = [r3, s3]
    if has_bias:
        in_specs.append(pl.BlockSpec((pl.Squeezed(), fac_bm, tn), s_idx))
        args.append(b3)
    in_specs += [
        pl.BlockSpec((pl.Squeezed(), tm, tk), x_idx),          # x tile
        pl.BlockSpec((tn, tk), w_idx),                         # weight tile (Fout, Fin) layout
    ]
    args += [x3, w_p]
    out_spec = pl.BlockSpec((pl.Squeezed(), tm, tn), o_idx)

    grid = [0, 0, 0, nk]
    grid[pe], grid[pm], grid[pn] = e_grid, m_blocks, n_blocks
    grid = tuple(grid)

    sems = ["parallel", "parallel", "parallel", "arbitrary"]
    if use_rx_cache:
        sems[pn] = "arbitrary"    # n carries the rx scratch fill: never split it across cores
    sems = tuple(sems)

    scratch = [pltpu.VMEM((tm, tn), jnp.float32)]              # f32 accumulator
    if use_rx_cache:
        scratch.append(pltpu.VMEM((nk, tm, tk), cdt))          # cached rx panel

    # --- explicit VMEM budget (v5e scoped default is only 16 MiB) ---------------------------
    out_isz = jnp.dtype(out_dtype).itemsize
    vmem_est = (2 * (tm * tk + tn * tk) * cdt.itemsize                 # x, W double-buffered
                + 2 * fac_bm * tk * cdt.itemsize                        # r blocks
                + 2 * fac_bm * tn * 4 * (2 if has_bias else 1)          # s (+bias) blocks
                + 2 * tm * tn * out_isz                                 # out block
                + tm * tn * 4                                           # accumulator
                + (rx_panel_bytes if use_rx_cache else 0))
    vmem_limit = int(min(max(32 << 20, 2 * vmem_est + (4 << 20)), 64 << 20))

    cost = pl.CostEstimate(
        flops=2 * total * fin * fout,
        transcendentals=0,
        bytes_accessed=(x.size * cdt.itemsize + weight.size * cdt.itemsize
                        + r_factor.size * cdt.itemsize
                        + (s_factor.size + (bias.size if has_bias else 0)) * 4
                        + total * fout * out_isz))

    grid_spec = pltpu.PrefetchScalarGridSpec(
        num_scalar_prefetch=0,
        grid=grid,
        in_specs=in_specs,
        out_specs=out_spec,
        scratch_shapes=scratch,
    )

    out_p = pl.pallas_call(
        _make_kernel(has_bias, use_rx_cache, pn),
        out_shape=jax.ShapeDtypeStruct((e_grid, rows_p, fout_p), out_dtype),
        grid_spec=grid_spec,
        compiler_params=pltpu.CompilerParams(
            dimension_semantics=sems,
            vmem_limit_bytes=vmem_limit),
        cost_estimate=cost,
    )(*args)

    # Metadata-only reshape when nothing was padded; otherwise strip the padding
    # (padded rows received 0*s + bias, so the slice must stay).
    if rows_p == rows and fout_p == fout:
        return out_p.reshape(total, fout)
    return out_p[:, :rows, :fout].reshape(total, fout)


# ------------------------------- reference + demo -----------------------------------------

def _reference(x, weight, r_factor, s_factor, bias=None):
    E, fin = r_factor.shape
    fout = s_factor.shape[1]
    rx = x.reshape(E, -1, fin) * r_factor[:, None, :]
    wrx = rx.reshape(-1, fin) @ weight.T
    y = wrx.reshape(E, -1, fout) * s_factor[:, None, :]
    if bias is not None:
        y = y + bias[:, None, :]
    return y.reshape(-1, fout)


def _check(name, out, ref, atol, rtol):
    assert out.shape == ref.shape, (name, out.shape, ref.shape)
    err = float(jnp.max(jnp.abs(out - ref)))
    assert bool(jnp.allclose(out, ref, atol=atol, rtol=rtol)), \
        f"{name}: mismatch vs reference (max abs err {err})"


def _make_inputs(key, E, per, fin, fout, bias_is):
    kx, kw, kr, ks, kb = jax.random.split(key, 5)
    x = jax.random.normal(kx, (E * per, fin), dtype=jnp.float32)
    # weight init mirrors reset_parameters(): N(mean=1.0, std=0.1); r/s/bias get
    # nontrivial values so the BatchEnsemble math is actually exercised.
    weight = 1.0 + 0.1 * jax.random.normal(kw, (fout, fin), dtype=jnp.float32)
    r = 1.0 + 0.1 * jax.random.normal(kr, (E, fin), dtype=jnp.float32)
    s = 1.0 + 0.1 * jax.random.normal(ks, (E, fout), dtype=jnp.float32)
    b = jax.random.normal(kb, (E, fout), dtype=jnp.float32) if bias_is else None
    return x, weight, r, s, b


if __name__ == "__main__":
    key = jax.random.PRNGKey(0)
    k1, k2, k3, k4 = jax.random.split(key, 4)

    # Case A: tiny demo shape (collapsed single-step grid, Fin 32->128, Fout 64->128), with bias.
    E, PER, FIN, FOUT = 4, 8, 32, 64
    x, w, r, s, b = _make_inputs(k1, E, PER, FIN, FOUT, bias_is=True)
    out = jax.block_until_ready(linear_batch_ensemble(x, w, r, s, b, mxu_dtype=None))
    _check("bias/f32/collapsed", out, _reference(x, w, r, s, b), atol=5e-2, rtol=2e-4)

    # Case B: same shapes, no bias (no-bias kernel variant).
    out = jax.block_until_ready(linear_batch_ensemble(x, w, r, s, None, mxu_dtype=None))
    _check("nobias/f32/collapsed", out, _reference(x, w, r, s, None), atol=5e-2, rtol=2e-4)

    # Case C: per-member grid path (E on the grid), Fin 96->128 and Fout 192->256 padding.
    xc, wc, rc, sc, bc = _make_inputs(k2, 4, 160, 96, 192, bias_is=True)
    out = jax.block_until_ready(linear_batch_ensemble(xc, wc, rc, sc, bc, mxu_dtype=None))
    _check("bias/f32/E-grid", out, _reference(xc, wc, rc, sc, bc), atol=5e-2, rtol=2e-4)

    # Case D: K-tiled accumulator path (Fin=1536 -> three K steps of 512) plus the forced
    #         N split of the degenerate collapsed grid (tn 256 -> 128, 2 N blocks).
    xd, wd, rd, sd, bd = _make_inputs(k3, 2, 32, 1536, 256, bias_is=True)
    out = jax.block_until_ready(linear_batch_ensemble(xd, wd, rd, sd, bd, mxu_dtype=None))
    _check("bias/f32/K-tiled", out, _reference(xd, wd, rd, sd, bd), atol=2e-1, rtol=1e-3)

    # Case E: default bf16 MXU operand streams (wrapper-side casts), loose tolerance.
    out = jax.block_until_ready(linear_batch_ensemble(x, w, r, s, b))
    _check("bias/bf16-mxu", out, _reference(x, w, r, s, b), atol=0.5, rtol=2e-2)

    # Case F: non-collapsed, M-tiled (rows 520 -> 768 with tm=256), 2 N blocks of 512 —
    #         exercises the rx-panel VMEM cache path (N innermost parallel axis, "arbitrary").
    xf, wf, rf, sf, bf = _make_inputs(k4, 2, 520, 384, 1024, bias_is=True)
    out = jax.block_until_ready(linear_batch_ensemble(xf, wf, rf, sf, bf, mxu_dtype=None))
    _check("bias/f32/rx-cache", out, _reference(xf, wf, rf, sf, bf), atol=2e-1, rtol=1e-3)

    print("KERNEL_OK")
</pallas_src>

<mosaic_0001>
module attributes {stable_mosaic.version = 11 : i64} {
  func.func @kernel(%arg0: i32, %arg1: i32, %arg2: i32, %arg3: i32, %arg4: memref<1x32x128xf32, #tpu.memory_space<vmem>>, %arg5: memref<1x32x128xf32, #tpu.memory_space<vmem>>, %arg6: memref<1x32x128xf32, #tpu.memory_space<vmem>>, %arg7: memref<1x32x128xf32, #tpu.memory_space<vmem>>, %arg8: memref<128x128xf32, #tpu.memory_space<vmem>>, %arg9: memref<1x32x128xf32, #tpu.memory_space<vmem>>, %arg10: memref<32x128xf32, #tpu.memory_space<vmem>>) attributes {dimension_semantics = [#tpu.dimension_semantics<parallel>, #tpu.dimension_semantics<parallel>, #tpu.dimension_semantics<parallel>, #tpu.dimension_semantics<arbitrary>], iteration_bounds = array<i64: 1, 1, 1, 1>, scalar_prefetch = 0 : i64, scratch_operands = 1 : i64, tpu.core_type = #tpu.core_type<tc>, window_params = [{transform_indices = @transform_0, window_bounds = array<i64: 1, 32, 128>}, {transform_indices = @transform_1, window_bounds = array<i64: 1, 32, 128>}, {transform_indices = @transform_2, window_bounds = array<i64: 1, 32, 128>}, {transform_indices = @transform_3, window_bounds = array<i64: 1, 32, 128>}, {transform_indices = @transform_4, window_bounds = array<i64: 128, 128>}, {transform_indices = @transform_5, window_bounds = array<i64: 1, 32, 128>}]} {
    %c0_i32 = arith.constant 0 : i32
    %0 = arith.cmpi eq, %arg3, %c0_i32 : i32
    %1 = arith.extui %0 : i1 to i32
    %c0_i32_0 = arith.constant 0 : i32
    %2 = arith.cmpi ne, %1, %c0_i32_0 : i32
    scf.if %2 {
      %cst_14 = arith.constant 0.000000e+00 : f32
      %16 = vector.broadcast %cst_14 : f32 to vector<32x128xf32>
      %c0_15 = arith.constant 0 : index
      %c0_16 = arith.constant 0 : index
      %17 = vector.load %arg10[%c0_15, %c0_16] : memref<32x128xf32, #tpu.memory_space<vmem>>, vector<32x128xf32>
      tpu.vector_store %arg10[%c0_15, %c0_16], %16 {strides = array<i32>} : memref<32x128xf32, #tpu.memory_space<vmem>>, vector<32x128xf32>,
    } else {
    }
    %c0 = arith.constant 0 : index
    %c0_1 = arith.constant 0 : index
    %c0_2 = arith.constant 0 : index
    %3 = vector.load %arg7[%c0, %c0_1, %c0_2] : memref<1x32x128xf32, #tpu.memory_space<vmem>>, vector<1x32x128xf32>
    %4 = vector.shape_cast %3 : vector<1x32x128xf32> to vector<32x128xf32>
    %c0_3 = arith.constant 0 : index
    %c0_4 = arith.constant 0 : index
    %c0_5 = arith.constant 0 : index
    %5 = vector.load %arg4[%c0_3, %c0_4, %c0_5] : memref<1x32x128xf32, #tpu.memory_space<vmem>>, vector<1x32x128xf32>
    %6 = vector.shape_cast %5 : vector<1x32x128xf32> to vector<32x128xf32>
    %7 = arith.mulf %4, %6 : vector<32x128xf32>
    %c0_6 = arith.constant 0 : index
    %c0_7 = arith.constant 0 : index
    %8 = vector.load %arg10[%c0_6, %c0_7] : memref<32x128xf32, #tpu.memory_space<vmem>>, vector<32x128xf32>
    %c0_8 = arith.constant 0 : index
    %c0_9 = arith.constant 0 : index
    %9 = vector.load %arg8[%c0_8, %c0_9] : memref<128x128xf32, #tpu.memory_space<vmem>>, vector<128x128xf32>
    %cst = arith.constant dense<0.000000e+00> : vector<32x128xf32>
    %10 = tpu.matmul %7, %9, %cst {dimension_numbers = #tpu.dot_dimension_numbers<[1], [1], [0], [0], [0, 0, 1, 0], [], []>} : vector<32x128xf32>, vector<128x128xf32>, vector<32x128xf32> -> vector<32x128xf32>
    %11 = arith.addf %8, %10 : vector<32x128xf32>
    %c0_10 = arith.constant 0 : index
    %c0_11 = arith.constant 0 : index
    %12 = vector.load %arg10[%c0_10, %c0_11] : memref<32x128xf32, #tpu.memory_space<vmem>>, vector<32x128xf32>
    tpu.vector_store %arg10[%c0_10, %c0_11], %11 {strides = array<i32>} : memref<32x128xf32, #tpu.memory_space<vmem>>, vector<32x128xf32>,
    %c0_i32_12 = arith.constant 0 : i32
    %13 = arith.cmpi eq, %arg3, %c0_i32_12 : i32
    %14 = arith.extui %13 : i1 to i32
    %c0_i32_13 = arith.constant 0 : i32
    %15 = arith.cmpi ne, %14, %c0_i32_13 : i32
    scf.if %15 {
      %c0_14 = arith.constant 0 : index
      %c0_15 = arith.constant 0 : index
      %16 = vector.load %arg10[%c0_14, %c0_15] : memref<32x128xf32, #tpu.memory_space<vmem>>, vector<32x128xf32>
      %c0_16 = arith.constant 0 : index
      %c0_17 = arith.constant 0 : index
      %c0_18 = arith.constant 0 : index
      %17 = vector.load %arg5[%c0_16, %c0_17, %c0_18] : memref<1x32x128xf32, #tpu.memory_space<vmem>>, vector<1x32x128xf32>
      %18 = vector.shape_cast %17 : vector<1x32x128xf32> to vector<32x128xf32>
      %19 = arith.mulf %16, %18 : vector<32x128xf32>
      %c0_19 = arith.constant 0 : index
      %c0_20 = arith.constant 0 : index
      %c0_21 = arith.constant 0 : index
      %20 = vector.load %arg6[%c0_19, %c0_20, %c0_21] : memref<1x32x128xf32, #tpu.memory_space<vmem>>, vector<1x32x128xf32>
      %21 = vector.shape_cast %20 : vector<1x32x128xf32> to vector<32x128xf32>
      %22 = arith.addf %19, %21 : vector<32x128xf32>
      %c0_22 = arith.constant 0 : index
      %c0_23 = arith.constant 0 : index
      %c0_24 = arith.constant 0 : index
      %23 = vector.load %arg9[%c0_22, %c0_23, %c0_24] : memref<1x32x128xf32, #tpu.memory_space<vmem>>, vector<1x32x128xf32>
      %24 = vector.shape_cast %23 : vector<1x32x128xf32> to vector<32x128xf32>
      %25 = vector.shape_cast %22 : vector<32x128xf32> to vector<1x32x128xf32>
      tpu.vector_store %arg9[%c0_22, %c0_23, %c0_24], %25 {strides = array<i32>} : memref<1x32x128xf32, #tpu.memory_space<vmem>>, vector<1x32x128xf32>,
    } else {
    }
    return
  }
  func.func @transform_0(%arg0: i32, %arg1: i32, %arg2: i32, %arg3: i32) -> (i32, i32, i32) {
    %c0_i32 = arith.constant 0 : i32
    return %arg0, %arg1, %arg3 : i32, i32, i32
  }
  func.func @transform_1(%arg0: i32, %arg1: i32, %arg2: i32, %arg3: i32) -> (i32, i32, i32) {
    %c0_i32 = arith.constant 0 : i32
    return %arg0, %arg1, %arg2 : i32, i32, i32
  }
  func.func @transform_2(%arg0: i32, %arg1: i32, %arg2: i32, %arg3: i32) -> (i32, i32, i32) {
    %c0_i32 = arith.constant 0 : i32
    return %arg0, %arg1, %arg2 : i32, i32, i32
  }
  func.func @transform_3(%arg0: i32, %arg1: i32, %arg2: i32, %arg3: i32) -> (i32, i32, i32) {
    %c0_i32 = arith.constant 0 : i32
    return %arg0, %arg1, %arg3 : i32, i32, i32
  }
  func.func @transform_4(%arg0: i32, %arg1: i32, %arg2: i32, %arg3: i32) -> (i32, i32) {
    %c0_i32 = arith.constant 0 : i32
    return %arg2, %arg3 : i32, i32
  }
  func.func @transform_5(%arg0: i32, %arg1: i32, %arg2: i32, %arg3: i32) -> (i32, i32, i32) {
    %c0_i32 = arith.constant 0 : i32
    return %arg0, %arg1, %arg2 : i32, i32, i32
  }
}

</mosaic_0001>

<llo_original>
// kernel: tpu_custom_call.1
$region0: #{tpu_custom_call.1}
  #allocation0 [shape = 'u32[]', space=smem, size = 0x4, offset = 0x4, fixed_abs, tag = 'smem constant byte address 0x4 - core index']
  #allocation1 [shape = 'u32[144,128]{1,0:T(1,128)}', space=vmem, size = 0x12000, scoped, tag = 'internal scratch']
  #allocation2 [shape = 'f32[32,128]{1,0:T(8,128)}', space=vmem, size = 0x4000, scoped, tag = 'scratch operand']
  %s0 = inlined_call_operand.hbm [shape: f32[1,32,128], index: 0, kind: input, shape index: {}]
  %s1 = inlined_call_operand.hbm [shape: f32[1,32,128], index: 1, kind: input, shape index: {}]
  %s2 = inlined_call_operand.hbm [shape: f32[1,32,128], index: 2, kind: input, shape index: {}]
  %s3 = inlined_call_operand.hbm [shape: f32[1,32,128], index: 3, kind: input, shape index: {}]
  %s4 = inlined_call_operand.hbm [shape: f32[128,128], index: 4, kind: input, shape index: {}]
  %s5 = inlined_call_operand.hbm [shape: f32[1,32,128], index: 5, kind: output, shape index: {}]
  %s6 = sld [smem:[#allocation0]]
  $region58: #{tpu_custom_call.1} parent=0
    _
  %s8 = ssub.s32 1, %s6
  %s9 = scalar_select 0, %s8, %s6
  $region1: #{tpu_custom_call.1} parent=0
    #allocation3 [shape = 'u8[16384]{0}', space=vmem, size = 0x4000, scoped, tag = 'input window, operand 0, single buffered']
    #allocation4 [shape = 's32[1]{0}', space=sflag, size = 0x4, scoped, tag = 'scoped memory for tpu_custom_call.1']
    #allocation5 [shape = 's32[1]{0}', space=sflag, size = 0x4, scoped, tag = 'scoped memory for tpu_custom_call.1']
    #allocation6 [shape = 'u8[16384]{0}', space=vmem, size = 0x4000, scoped, tag = 'input window, operand 1, single buffered']
    #allocation7 [shape = 's32[1]{0}', space=sflag, size = 0x4, scoped, tag = 'scoped memory for tpu_custom_call.1']
    #allocation8 [shape = 'u8[16384]{0}', space=vmem, size = 0x4000, scoped, tag = 'input window, operand 2, single buffered']
    #allocation9 [shape = 'u8[16384]{0}', space=vmem, size = 0x4000, scoped, tag = 'input window, operand 3, single buffered']
    #allocation10 [shape = 's32[1]{0}', space=sflag, size = 0x4, scoped, tag = 'scoped memory for tpu_custom_call.1']
    #allocation11 [shape = 'u8[65536]{0}', space=vmem, size = 0x10000, scoped, tag = 'input window, operand 4, single buffered']
    #allocation12 [shape = 'u8[16384]{0}', space=vmem, size = 0x4000, scoped, tag = 'output window, operand 0, single buffered']
    %10 = vsyncpa [#allocation4], 0
    %11 = vsyncpa [#allocation7], 0
    %12 = vsyncpa [#allocation10], 0
    %13 = vsyncpa [#allocation5], 0
    // Predicated region
    $region2: #{tpu_custom_call.1} parent=1 // pred_check
      _
    $region3: #{tpu_custom_call.1} parent=1 // pred_check_branch
      %15 = sbr.rel (0) target = $region5
    $region4: #{tpu_custom_call.1} parent=1 // pred_region
      %s17 = ssub.s32 512, 512
      %18 = vsyncadd [#allocation4], %s17
      %s19 = sshll.u32 [#allocation3], 4
      %s20 = int_to_ptr.vmem [resolvable:$true] %s19
      %25 = dma.hbm_to_vmem [thread:$0]  %s0, 512, %s20, [#allocation4], 128, 128, 8
    $region5: #{tpu_custom_call.1} parent=1 // pred_fallthru
      _
    // Predicated region
    $region6: #{tpu_custom_call.1} parent=1 // pred_check
      _
    $region7: #{tpu_custom_call.1} parent=1 // pred_check_branch
      %27 = sbr.rel (0) target = $region9
    $region8: #{tpu_custom_call.1} parent=1 // pred_region
      %s29 = ssub.s32 512, 512
      %30 = vsyncadd [#allocation7], %s29
      %s31 = sshll.u32 [#allocation6], 4
      %s32 = int_to_ptr.vmem [resolvable:$true] %s31
      %37 = dma.hbm_to_vmem [thread:$0]  %s1, 512, %s32, [#allocation7], 128, 128, 8
    $region9: #{tpu_custom_call.1} parent=1 // pred_fallthru
      _
    // Predicated region
    $region10: #{tpu_custom_call.1} parent=1 // pred_check
      _
    $region11: #{tpu_custom_call.1} parent=1 // pred_check_branch
      %39 = sbr.rel (0) target = $region13
    $region12: #{tpu_custom_call.1} parent=1 // pred_region
      %s41 = ssub.s32 512, 512
      %42 = vsyncadd [#allocation7], %s41
      %s43 = sshll.u32 [#allocation8], 4
      %s44 = int_to_ptr.vmem [resolvable:$true] %s43
      %49 = dma.hbm_to_vmem [thread:$0]  %s2, 512, %s44, [#allocation7], 128, 128, 8
    $region13: #{tpu_custom_call.1} parent=1 // pred_fallthru
      _
    // Predicated region
    $region14: #{tpu_custom_call.1} parent=1 // pred_check
      _
    $region15: #{tpu_custom_call.1} parent=1 // pred_check_branch
      %51 = sbr.rel (0) target = $region17
    $region16: #{tpu_custom_call.1} parent=1 // pred_region
      %s53 = ssub.s32 512, 512
      %54 = vsyncadd [#allocation10], %s53
      %s55 = sshll.u32 [#allocation9], 4
      %s56 = int_to_ptr.vmem [resolvable:$true] %s55
      %61 = dma.hbm_to_vmem [thread:$0]  %s3, 512, %s56, [#allocation10], 128, 128, 8
    $region17: #{tpu_custom_call.1} parent=1 // pred_fallthru
      _
    // Predicated region
    $region18: #{tpu_custom_call.1} parent=1 // pred_check
      _
    $region19: #{tpu_custom_call.1} parent=1 // pred_check_branch
      %63 = sbr.rel (0) target = $region21
    $region20: #{tpu_custom_call.1} parent=1 // pred_region
      %s65 = ssub.s32 2048, 2048
      %66 = vsyncadd [#allocation10], %s65
      %s67 = sshll.u32 [#allocation11], 4
      %s68 = int_to_ptr.vmem [resolvable:$true] %s67
      %73 = dma.hbm_to_vmem [thread:$0]  %s4, 2048, %s68, [#allocation10], 128, 128, 8
    $region21: #{tpu_custom_call.1} parent=1 // pred_fallthru
      _
    // Predicated region
    $region22: #{tpu_custom_call.1} parent=1 // pred_check
      _
    $region23: #{tpu_custom_call.1} parent=1 // pred_check_branch
      %75 = sbr.rel (0) target = $region25
    $region24: #{tpu_custom_call.1} parent=1 // pred_region
      %76 = dma.done [#allocation4], 512
    $region25: #{tpu_custom_call.1} parent=1 // pred_fallthru
      _
    // Predicated region
    $region26: #{tpu_custom_call.1} parent=1 // pred_check
      _
    $region27: #{tpu_custom_call.1} parent=1 // pred_check_branch
      %78 = sbr.rel (0) target = $region29
    $region28: #{tpu_custom_call.1} parent=1 // pred_region
      %79 = dma.done [#allocation7], 512
    $region29: #{tpu_custom_call.1} parent=1 // pred_fallthru
      _
    // Predicated region
    $region30: #{tpu_custom_call.1} parent=1 // pred_check
      _
    $region31: #{tpu_custom_call.1} parent=1 // pred_check_branch
      %81 = sbr.rel (0) target = $region33
    $region32: #{tpu_custom_call.1} parent=1 // pred_region
      %82 = dma.done [#allocation7], 512
    $region33: #{tpu_custom_call.1} parent=1 // pred_fallthru
      _
    // Predicated region
    $region34: #{tpu_custom_call.1} parent=1 // pred_check
      _
    $region35: #{tpu_custom_call.1} parent=1 // pred_check_branch
      %84 = sbr.rel (0) target = $region37
    $region36: #{tpu_custom_call.1} parent=1 // pred_region
      %85 = dma.done [#allocation10], 512
    $region37: #{tpu_custom_call.1} parent=1 // pred_fallthru
      _
    // Predicated region
    $region38: #{tpu_custom_call.1} parent=1 // pred_check
      _
    $region39: #{tpu_custom_call.1} parent=1 // pred_check_branch
      %87 = sbr.rel (0) target = $region41
    $region40: #{tpu_custom_call.1} parent=1 // pred_region
      %88 = dma.done [#allocation10], 2048
    $region41: #{tpu_custom_call.1} parent=1 // pred_fallthru
      _
    %p89 = scmp.eq.s32.totalorder 0, 0
    // Predicated region
    $region42: #{tpu_custom_call.1} parent=1 // pred_check
      %p90 = pneg %p89
    $region43: #{tpu_custom_call.1} parent=1 // pred_check_branch
      %92 = sbr.rel (%p90) target = $region45
    $region44: #{tpu_custom_call.1} parent=1 // pred_region
      %93 = vst [vmem:[#allocation2] sm:$0xff] 0.0
      %94 = vst [vmem:[#allocation2 + $0x8] sm:$0xff] 0.0
      %95 = vst [vmem:[#allocation2 + $0x10] sm:$0xff] 0.0
      %96 = vst [vmem:[#allocation2 + $0x18] sm:$0xff] 0.0
    $region45: #{tpu_custom_call.1} parent=1 // pred_fallthru
      _
    %v97 = vld [vmem:[#allocation9] sm:$0xff]
    %v98 = vld [vmem:[#allocation9 + $0x8] sm:$0xff]
    %v99 = vld [vmem:[#allocation9 + $0x10] sm:$0xff]
    %v100 = vld [vmem:[#allocation9 + $0x18] sm:$0xff]
    %v101 = vld [vmem:[#allocation3] sm:$0xff]
    %v102 = vld [vmem:[#allocation3 + $0x8] sm:$0xff]
    %v103 = vld [vmem:[#allocation3 + $0x10] sm:$0xff]
    %v104 = vld [vmem:[#allocation3 + $0x18] sm:$0xff]
    %v105 = vmul.f32 %v97, %v101
    %v106 = vmul.f32 %v98, %v102
    %v107 = vmul.f32 %v99, %v103
    %v108 = vmul.f32 %v100, %v104
    %v109 = vld [vmem:[#allocation2] sm:$0xff]
    %v110 = vld [vmem:[#allocation2 + $0x8] sm:$0xff]
    %v111 = vld [vmem:[#allocation2 + $0x10] sm:$0xff]
    %v112 = vld [vmem:[#allocation2 + $0x18] sm:$0xff]
    %v113 = vld [vmem:[#allocation11] sm:$0xff]
    %v114 = vld [vmem:[#allocation11 + $0x8] sm:$0xff]
    %v115 = vld [vmem:[#allocation11 + $0x10] sm:$0xff]
    %v116 = vld [vmem:[#allocation11 + $0x18] sm:$0xff]
    %v117 = vld [vmem:[#allocation11 + $0x20] sm:$0xff]
    %v118 = vld [vmem:[#allocation11 + $0x28] sm:$0xff]
    %v119 = vld [vmem:[#allocation11 + $0x30] sm:$0xff]
    %v120 = vld [vmem:[#allocation11 + $0x38] sm:$0xff]
    %v121 = vld [vmem:[#allocation11 + $0x40] sm:$0xff]
    %v122 = vld [vmem:[#allocation11 + $0x48] sm:$0xff]
    %v123 = vld [vmem:[#allocation11 + $0x50] sm:$0xff]
    %v124 = vld [vmem:[#allocation11 + $0x58] sm:$0xff]
    %v125 = vld [vmem:[#allocation11 + $0x60] sm:$0xff]
    %v126 = vld [vmem:[#allocation11 + $0x68] sm:$0xff]
    %v127 = vld [vmem:[#allocation11 + $0x70] sm:$0xff]
    %v128 = vld [vmem:[#allocation11 + $0x78] sm:$0xff]
    %129 = vmatprep.subr.mxu0 0.0
    %130 = vmatpush1.xpose.msra.mxu0 %v113
    %131 = vmatprep.subr.mxu0 0.0
    %132 = vmatpush1.xpose.msra.mxu0 %v114
    %133 = vmatprep.subr.mxu0 0.0
    %134 = vmatpush1.xpose.msra.mxu0 %v115
    %135 = vmatprep.subr.mxu0 0.0
    %136 = vmatpush1.xpose.msra.mxu0 %v116
    %137 = vmatprep.subr.mxu0 0.0
    %138 = vmatpush1.xpose.msra.mxu0 %v117
    %139 = vmatprep.subr.mxu0 0.0
    %140 = vmatpush1.xpose.msra.mxu0 %v118
    %141 = vmatprep.subr.mxu0 0.0
    %142 = vmatpush1.xpose.msra.mxu0 %v119
    %143 = vmatprep.subr.mxu0 0.0
    %144 = vmatpush1.xpose.msra.mxu0 %v120
    %145 = vmatprep.subr.mxu0 0.0
    %146 = vmatpush1.xpose.msra.mxu0 %v121
    %147 = vmatprep.subr.mxu0 0.0
    %148 = vmatpush1.xpose.msra.mxu0 %v122
    %149 = vmatprep.subr.mxu0 0.0
    %150 = vmatpush1.xpose.msra.mxu0 %v123
    %151 = vmatprep.subr.mxu0 0.0
    %152 = vmatpush1.xpose.msra.mxu0 %v124
    %153 = vmatprep.subr.mxu0 0.0
    %154 = vmatpush1.xpose.msra.mxu0 %v125
    %155 = vmatprep.subr.mxu0 0.0
    %156 = vmatpush1.xpose.msra.mxu0 %v126
    %157 = vmatprep.subr.mxu0 0.0
    %158 = vmatpush1.xpose.msra.mxu0 %v127
    %159 = vmatprep.subr.mxu0 0.0
    %160 = vmatpush1.xpose.msra.mxu0 %v128
    %161 = vmatprep.subr.mxu0 0.0
    %162 = vmatpush1.xpose.msra.mxu0 0.0
    %163 = vmatprep.subr.mxu0 0.0
    %164 = vmatpush1.xpose.msra.mxu0 0.0
    %165 = vmatprep.subr.mxu0 0.0
    %166 = vmatpush1.xpose.msra.mxu0 0.0
    %167 = vmatprep.subr.mxu0 0.0
    %168 = vmatpush1.xpose.msra.mxu0 0.0
    %169 = vmatprep.subr.mxu0 0.0
    %170 = vmatpush1.xpose.msra.mxu0 0.0
    %171 = vmatprep.subr.mxu0 0.0
    %172 = vmatpush1.xpose.msra.mxu0 0.0
    %173 = vmatprep.subr.mxu0 0.0
    %174 = vmatpush1.xpose.msra.mxu0 0.0
    %175 = vmatprep.subr.mxu0 0.0
    %176 = vmatpush1.xpose.msra.mxu0 0.0
    %177 = vmatprep.subr.mxu0 0.0
    %178 = vmatpush1.xpose.msra.mxu0 0.0
    %179 = vmatprep.subr.mxu0 0.0
    %180 = vmatpush1.xpose.msra.mxu0 0.0
    %181 = vmatprep.subr.mxu0 0.0
    %182 = vmatpush1.xpose.msra.mxu0 0.0
    %183 = vmatprep.subr.mxu0 0.0
    %184 = vmatpush1.xpose.msra.mxu0 0.0
    %185 = vmatprep.subr.mxu0 0.0
    %186 = vmatpush1.xpose.msra.mxu0 0.0
    %187 = vmatprep.subr.mxu0 0.0
    %188 = vmatpush1.xpose.msra.mxu0 0.0
    %189 = vmatprep.subr.mxu0 0.0
    %190 = vmatpush1.xpose.msra.mxu0 0.0
    %191 = vmatprep.subr.mxu0 0.0
    %192 = vmatpush1.xpose.msra.mxu0 0.0
    %193 = vmatprep.mubr.f32.mxu0 0.0
    %194 = vmatmul.mubr.f32.gmra.mrb[0].mxu0 %v105
    %v195 = vpop.f32.mrb[0].mxu0
    %v196 = vadd.f32 0.0, %v195
    %v197 = vpop.f32.mrb[0].mxu0
    %198 = vmatprep.mubr.f32.mxu0 0.0
    %199 = vmatmul.mubr.f32.gmra.mrb[0].mxu0 %v106
    %v200 = vpop.f32.mrb[0].mxu0
    %v201 = vadd.f32 0.0, %v200
    %v202 = vpop.f32.mrb[0].mxu0
    %203 = vmatprep.mubr.f32.mxu0 0.0
    %204 = vmatmul.mubr.f32.gmra.mrb[0].mxu0 %v107
    %v205 = vpop.f32.mrb[0].mxu0
    %v206 = vadd.f32 0.0, %v205
    %v207 = vpop.f32.mrb[0].mxu0
    %208 = vmatprep.mubr.f32.mxu0 0.0
    %209 = vmatmul.mubr.f32.gmra.mrb[0].mxu0 %v108
    %v210 = vpop.f32.mrb[0].mxu0
    %v211 = vadd.f32 0.0, %v210
    %v212 = vpop.f32.mrb[0].mxu0
    %213 = vdwg.mxu0
    %v214 = vadd.f32 %v109, %v196
    %v215 = vadd.f32 %v110, %v201
    %v216 = vadd.f32 %v111, %v206
    %v217 = vadd.f32 %v112, %v211
    %218 = vst [vmem:[#allocation2] sm:$0xff] %v214
    %219 = vst [vmem:[#allocation2 + $0x8] sm:$0xff] %v215
    %220 = vst [vmem:[#allocation2 + $0x10] sm:$0xff] %v216
    %221 = vst [vmem:[#allocation2 + $0x18] sm:$0xff] %v217
    // Predicated region
    $region46: #{tpu_custom_call.1} parent=1 // pred_check
      %p222 = pneg %p89
    $region47: #{tpu_custom_call.1} parent=1 // pred_check_branch
      %224 = sbr.rel (%p222) target = $region49
    $region48: #{tpu_custom_call.1} parent=1 // pred_region
      %v225 = vld [vmem:[#allocation2] sm:$0xff]
      %v226 = vld [vmem:[#allocation2 + $0x8] sm:$0xff]
      %v227 = vld [vmem:[#allocation2 + $0x10] sm:$0xff]
      %v228 = vld [vmem:[#allocation2 + $0x18] sm:$0xff]
      %v229 = vld [vmem:[#allocation6] sm:$0xff]
      %v230 = vld [vmem:[#allocation6 + $0x8] sm:$0xff]
      %v231 = vld [vmem:[#allocation6 + $0x10] sm:$0xff]
      %v232 = vld [vmem:[#allocation6 + $0x18] sm:$0xff]
      %v233 = vmul.f32 %v225, %v229
      %v234 = vmul.f32 %v226, %v230
      %v235 = vmul.f32 %v227, %v231
      %v236 = vmul.f32 %v228, %v232
      %v237 = vld [vmem:[#allocation8] sm:$0xff]
      %v238 = vld [vmem:[#allocation8 + $0x8] sm:$0xff]
      %v239 = vld [vmem:[#allocation8 + $0x10] sm:$0xff]
      %v240 = vld [vmem:[#allocation8 + $0x18] sm:$0xff]
      %v241 = vadd.f32 %v233, %v237
      %v242 = vadd.f32 %v234, %v238
      %v243 = vadd.f32 %v235, %v239
      %v244 = vadd.f32 %v236, %v240
      %245 = vst [vmem:[#allocation12] sm:$0xff] %v241
      %246 = vst [vmem:[#allocation12 + $0x8] sm:$0xff] %v242
      %247 = vst [vmem:[#allocation12 + $0x10] sm:$0xff] %v243
      %248 = vst [vmem:[#allocation12 + $0x18] sm:$0xff] %v244
    $region49: #{tpu_custom_call.1} parent=1 // pred_fallthru
      _
    // Predicated region
    $region50: #{tpu_custom_call.1} parent=1 // pred_check
      _
    $region51: #{tpu_custom_call.1} parent=1 // pred_check_branch
      %250 = sbr.rel (0) target = $region53
    $region52: #{tpu_custom_call.1} parent=1 // pred_region
      %s252 = ssub.s32 512, 512
      %253 = vsyncadd [#allocation5], %s252
      %s254 = sshll.u32 [#allocation12], 4
      %s255 = int_to_ptr.vmem [resolvable:$true] %s254
      %260 = dma.vmem_to_hbm [thread:$0]  %s255, 512, %s5, [#allocation5], 128, 128, 8
    $region53: #{tpu_custom_call.1} parent=1 // pred_fallthru
      _
    // Predicated region
    $region54: #{tpu_custom_call.1} parent=1 // pred_check
      _
    $region55: #{tpu_custom_call.1} parent=1 // pred_check_branch
      %262 = sbr.rel (0) target = $region57
    $region56: #{tpu_custom_call.1} parent=1 // pred_region
      %263 = dma.done [#allocation5], 512
    $region57: #{tpu_custom_call.1} parent=1 // pred_fallthru
      _
    %264 = vsyncpa [#allocation4], 1
    %265 = vsyncpa [#allocation7], 1
    %266 = vsyncpa [#allocation10], 1
    %267 = vsyncpa [#allocation5], 1

</llo_original>
